<compile_context>
chip_gen: v6e
topology: v6e:2x2x1
jax: 0.10.0
libtpu: 0.0.40
codegen_flags: <defaults>
</compile_context>

<pallas_src>
import jax
import jax.numpy as jnp
from jax.experimental import pallas as pl
from jax.experimental.pallas import tpu as pltpu


def _round_up(x: int, m: int) -> int:
    return (x + m - 1) // m * m


def _linkpred_kernel(zs_ref, zd_ref, ws_ref, wd_ref, b_ref, wo_ref, bo_ref, o_ref):
    """One batch tile.

    zs_ref: (TB, dim)    z_src tile (input dtype, pipelined)
    zd_ref: (TB, dim)    z_dst tile (input dtype, pipelined)
    ws_ref: (dim, dim)   lin_src weight, (in, out) layout (compute dtype, resident)
    wd_ref: (dim, dim)   lin_dst weight, (in, out) layout (compute dtype, resident)
    b_ref : (1, dim)     b_src + b_dst                    (f32, resident)
    wo_ref: (1, dim)     lin_out weight as a row          (f32, resident)
    bo_ref: (1,)         lin_out bias scalar              (f32, SMEM)
    o_ref : (TB, 1)      sigmoid(logits)                  (f32)
    """
    cdt = ws_ref.dtype
    zs = zs_ref[...].astype(cdt)          # in-kernel cast: VPU, free filler
    zd = zd_ref[...].astype(cdt)
    # Two accumulating MXU matmuls with f32 accumulation.
    h = jnp.dot(zs, ws_ref[...], preferred_element_type=jnp.float32)
    h = h + jnp.dot(zd, wd_ref[...], preferred_element_type=jnp.float32)
    h = jnp.maximum(h + b_ref[...], 0.0)                        # bias + ReLU (VPU)
    # Output projection on VPU (mul) + XLU (lane reduce) instead of N=1 MXU op.
    logit = jnp.sum(h * wo_ref[...], axis=-1, keepdims=True) + bo_ref[0]
    o_ref[...] = jax.nn.sigmoid(logit).astype(o_ref.dtype)


def link_predictor(z_src, z_dst, params, *, tb=None, compute_dtype=jnp.float32):
    """params: dict with w_src, b_src, w_dst, b_dst, w_out, b_out.
    Linear weights are already transposed to (in_features, out_features)."""
    B, dim_in = z_src.shape
    dim_out = params["w_src"].shape[1]
    z_bytes = jnp.dtype(z_src.dtype).itemsize
    w_bytes = jnp.dtype(compute_dtype).itemsize

    # ---- Batch-tile selection (scale with dim so buffers stay in a few MiB) ----
    # Per-row VMEM cost of the pipelined buffers: 2 z inputs x 2 buffers, plus the
    # (tb, 1) f32 output block (lane-padded to 128 in VMEM) x 2 buffers.
    per_row = 2 * 2 * dim_in * z_bytes + 2 * 128 * 4
    if tb is None:
        budget = 16 << 20                             # ~16 MiB for pipelined buffers
        tb = max(256, min(8192, budget // per_row))
    tb = _round_up(min(int(tb), _round_up(B, 128)), 128)
    grid = (pl.cdiv(B, tb),)                          # partial tail tile -> masked writes

    # ---- One-time parameter staging (tiny; activations are NOT touched) --------
    w_src = params["w_src"].astype(compute_dtype)                     # (dim_in, dim_out)
    w_dst = params["w_dst"].astype(compute_dtype)
    b_fused = (params["b_src"] + params["b_dst"]).reshape(1, dim_out).astype(jnp.float32)
    w_out_row = params["w_out"].reshape(1, dim_out).astype(jnp.float32)
    b_out = params["b_out"].reshape(1).astype(jnp.float32)            # (1,) SMEM scalar

    # ---- Explicit VMEM budget (v5e 16 MiB scoped default / v7x 64 MiB physical) -
    resident = 2 * 2 * dim_in * dim_out * w_bytes + 4 * 8 * 128 * 4
    footprint = tb * per_row + resident
    vmem_limit = int(min(64 << 20, max(32 << 20, footprint + (8 << 20))))

    cost = pl.CostEstimate(
        flops=4 * B * dim_in * dim_out + 4 * B * dim_out,
        transcendentals=B,
        bytes_accessed=2 * B * dim_in * z_bytes + B * 4 + 2 * dim_in * dim_out * w_bytes,
    )

    out = pl.pallas_call(
        _linkpred_kernel,
        out_shape=jax.ShapeDtypeStruct((B, 1), jnp.float32),
        grid=grid,
        in_specs=[
            # Batch-tiled activations (pipelined across the grid, no staging copy).
            pl.BlockSpec((tb, dim_in), lambda i: (i, 0)),          # z_src
            pl.BlockSpec((tb, dim_in), lambda i: (i, 0)),          # z_dst
            # Weights / biases: same block every step -> VMEM resident.
            pl.BlockSpec((dim_in, dim_out), lambda i: (0, 0)),     # w_src
            pl.BlockSpec((dim_in, dim_out), lambda i: (0, 0)),     # w_dst
            pl.BlockSpec((1, dim_out), lambda i: (0, 0)),          # b_src + b_dst
            pl.BlockSpec((1, dim_out), lambda i: (0, 0)),          # w_out row
            # Scalar output bias lives in SMEM (no 8x128-padded VMEM tile).
            pl.BlockSpec(memory_space=pltpu.MemorySpace.SMEM),     # b_out
        ],
        out_specs=pl.BlockSpec((tb, 1), lambda i: (i, 0)),
        compiler_params=pltpu.CompilerParams(
            dimension_semantics=("parallel",),   # megacore sharding where available
            vmem_limit_bytes=vmem_limit,
        ),
        cost_estimate=cost,
    )(z_src, z_dst, w_src, w_dst, b_fused, w_out_row, b_out)

    return out.reshape(-1)   # .view(-1) in the PyTorch module


def init_params(key, dim):
    """Deterministic synthetic init matching nn.Linear shapes (pre-transposed)."""
    ks = jax.random.split(key, 6)
    bound = 1.0 / jnp.sqrt(dim)
    return {
        "w_src": jax.random.uniform(ks[0], (dim, dim), jnp.float32, -bound, bound),
        "b_src": jax.random.uniform(ks[1], (dim,), jnp.float32, -bound, bound),
        "w_dst": jax.random.uniform(ks[2], (dim, dim), jnp.float32, -bound, bound),
        "b_dst": jax.random.uniform(ks[3], (dim,), jnp.float32, -bound, bound),
        "w_out": jax.random.uniform(ks[4], (dim, 1), jnp.float32, -bound, bound),
        "b_out": jax.random.uniform(ks[5], (1,), jnp.float32, -bound, bound),
    }


def _reference(z_src, z_dst, p):
    h = z_src @ p["w_src"] + p["b_src"] + z_dst @ p["w_dst"] + p["b_dst"]
    h = jnp.maximum(h, 0.0)
    return jax.nn.sigmoid(h @ p["w_out"] + p["b_out"]).reshape(-1)


if __name__ == "__main__":
    B, dim = 200, 32          # B not a multiple of the tile -> exercises the masked tail tile
    key = jax.random.PRNGKey(0)
    k_src, k_dst, k_par = jax.random.split(key, 3)

    z_src = jax.random.normal(k_src, (B, dim), jnp.float32)
    z_dst = jax.random.normal(k_dst, (B, dim), jnp.float32)
    params = init_params(k_par, dim)

    ref = _reference(z_src, z_dst, params)

    # f32 path with a small explicit tile -> multi-step grid + partial tail tile.
    out_f32 = jax.block_until_ready(
        link_predictor(z_src, z_dst, params, tb=128, compute_dtype=jnp.float32))
    assert out_f32.shape == (B,)
    assert jnp.allclose(out_f32, ref, atol=1e-5, rtol=1e-5)

    # Auto-tiled bf16-weight path (performance config): f32 accumulation, loose tol.
    out_bf16 = jax.block_until_ready(
        link_predictor(z_src, z_dst, params, compute_dtype=jnp.bfloat16))
    assert out_bf16.shape == (B,)
    assert jnp.allclose(out_bf16, ref, atol=3e-2, rtol=0.0)

    print("KERNEL_OK")
</pallas_src>

<mosaic_0001>
module attributes {stable_mosaic.version = 11 : i64} {
  func.func @_linkpred_kernel(%arg0: i32, %arg1: memref<128x32xf32, #tpu.memory_space<vmem>>, %arg2: memref<128x32xf32, #tpu.memory_space<vmem>>, %arg3: memref<32x32xf32, #tpu.memory_space<vmem>>, %arg4: memref<32x32xf32, #tpu.memory_space<vmem>>, %arg5: memref<1x32xf32, #tpu.memory_space<vmem>>, %arg6: memref<1x32xf32, #tpu.memory_space<vmem>>, %arg7: memref<1xf32, #tpu.memory_space<smem>>, %arg8: memref<128x1xf32, #tpu.memory_space<vmem>>) attributes {dimension_semantics = [#tpu.dimension_semantics<parallel>], iteration_bounds = array<i64: 2>, scalar_prefetch = 0 : i64, scratch_operands = 0 : i64, tpu.core_type = #tpu.core_type<tc>, window_params = [{transform_indices = @transform_0, window_bounds = array<i64: 128, 32>}, {transform_indices = @transform_1, window_bounds = array<i64: 128, 32>}, {pipeline_mode = #tpu.pipeline_mode<synchronous>, transform_indices = @transform_2, window_bounds = array<i64: 32, 32>}, {pipeline_mode = #tpu.pipeline_mode<synchronous>, transform_indices = @transform_3, window_bounds = array<i64: 32, 32>}, {pipeline_mode = #tpu.pipeline_mode<synchronous>, transform_indices = @transform_4, window_bounds = array<i64: 1, 32>}, {pipeline_mode = #tpu.pipeline_mode<synchronous>, transform_indices = @transform_5, window_bounds = array<i64: 1, 32>}, {transform_indices = @transform_6, window_bounds = array<i64: 1>}, {transform_indices = @transform_7, window_bounds = array<i64: 128, 1>}]} {
    %c0 = arith.constant 0 : index
    %c0_0 = arith.constant 0 : index
    %0 = vector.load %arg1[%c0, %c0_0] : memref<128x32xf32, #tpu.memory_space<vmem>>, vector<128x32xf32>
    %c0_1 = arith.constant 0 : index
    %c0_2 = arith.constant 0 : index
    %1 = vector.load %arg2[%c0_1, %c0_2] : memref<128x32xf32, #tpu.memory_space<vmem>>, vector<128x32xf32>
    %c0_3 = arith.constant 0 : index
    %c0_4 = arith.constant 0 : index
    %2 = vector.load %arg3[%c0_3, %c0_4] : memref<32x32xf32, #tpu.memory_space<vmem>>, vector<32x32xf32>
    %cst = arith.constant dense<0.000000e+00> : vector<128x32xf32>
    %3 = tpu.matmul %0, %2, %cst {dimension_numbers = #tpu.dot_dimension_numbers<[1], [0], [0], [1], [0, 0, 1, 1], [], []>} : vector<128x32xf32>, vector<32x32xf32>, vector<128x32xf32> -> vector<128x32xf32>
    %c0_5 = arith.constant 0 : index
    %c0_6 = arith.constant 0 : index
    %4 = vector.load %arg4[%c0_5, %c0_6] : memref<32x32xf32, #tpu.memory_space<vmem>>, vector<32x32xf32>
    %cst_7 = arith.constant dense<0.000000e+00> : vector<128x32xf32>
    %5 = tpu.matmul %1, %4, %cst_7 {dimension_numbers = #tpu.dot_dimension_numbers<[1], [0], [0], [1], [0, 0, 1, 1], [], []>} : vector<128x32xf32>, vector<32x32xf32>, vector<128x32xf32> -> vector<128x32xf32>
    %6 = arith.addf %3, %5 : vector<128x32xf32>
    %c0_8 = arith.constant 0 : index
    %c0_9 = arith.constant 0 : index
    %7 = vector.load %arg5[%c0_8, %c0_9] : memref<1x32xf32, #tpu.memory_space<vmem>>, vector<1x32xf32>
    %8 = vector.broadcast %7 : vector<1x32xf32> to vector<128x32xf32>
    %9 = arith.addf %6, %8 : vector<128x32xf32>
    %cst_10 = arith.constant 0.000000e+00 : f32
    %10 = vector.broadcast %cst_10 : f32 to vector<128x32xf32>
    %11 = arith.maximumf %9, %10 : vector<128x32xf32>
    %c0_11 = arith.constant 0 : index
    %c0_12 = arith.constant 0 : index
    %12 = vector.load %arg6[%c0_11, %c0_12] : memref<1x32xf32, #tpu.memory_space<vmem>>, vector<1x32xf32>
    %13 = vector.broadcast %12 : vector<1x32xf32> to vector<128x32xf32>
    %14 = arith.mulf %11, %13 : vector<128x32xf32>
    %cst_13 = arith.constant dense<0.000000e+00> : vector<128xf32>
    %15 = vector.multi_reduction <add>, %14, %cst_13 [1] : vector<128x32xf32> to vector<128xf32>
    %16 = vector.shape_cast %15 : vector<128xf32> to vector<128x1xf32>
    %c0_14 = arith.constant 0 : index
    %17 = memref.load %arg7[%c0_14] : memref<1xf32, #tpu.memory_space<smem>>
    %18 = vector.broadcast %17 : f32 to vector<128x1xf32>
    %19 = arith.addf %16, %18 : vector<128x1xf32>
    %20 = arith.negf %19 : vector<128x1xf32>
    %21 = math.exp %20 : vector<128x1xf32>
    %cst_15 = arith.constant 1.000000e+00 : f32
    %22 = vector.broadcast %cst_15 : f32 to vector<128x1xf32>
    %23 = arith.addf %22, %21 : vector<128x1xf32>
    %24 = arith.divf %22, %23 : vector<128x1xf32>
    %c0_16 = arith.constant 0 : index
    %c0_17 = arith.constant 0 : index
    %25 = vector.load %arg8[%c0_16, %c0_17] : memref<128x1xf32, #tpu.memory_space<vmem>>, vector<128x1xf32>
    tpu.vector_store %arg8[%c0_16, %c0_17], %24 {strides = array<i32>} : memref<128x1xf32, #tpu.memory_space<vmem>>, vector<128x1xf32>,
    return
  }
  func.func @transform_0(%arg0: i32) -> (i32, i32) {
    %c0_i32 = arith.constant 0 : i32
    %c0_i32_0 = arith.constant 0 : i32
    return %arg0, %c0_i32 : i32, i32
  }
  func.func @transform_1(%arg0: i32) -> (i32, i32) {
    %c0_i32 = arith.constant 0 : i32
    %c0_i32_0 = arith.constant 0 : i32
    return %arg0, %c0_i32 : i32, i32
  }
  func.func @transform_2(%arg0: i32) -> (i32, i32) {
    %c0_i32 = arith.constant 0 : i32
    %c0_i32_0 = arith.constant 0 : i32
    %c0_i32_1 = arith.constant 0 : i32
    return %c0_i32, %c0_i32_0 : i32, i32
  }
  func.func @transform_3(%arg0: i32) -> (i32, i32) {
    %c0_i32 = arith.constant 0 : i32
    %c0_i32_0 = arith.constant 0 : i32
    %c0_i32_1 = arith.constant 0 : i32
    return %c0_i32, %c0_i32_0 : i32, i32
  }
  func.func @transform_4(%arg0: i32) -> (i32, i32) {
    %c0_i32 = arith.constant 0 : i32
    %c0_i32_0 = arith.constant 0 : i32
    %c0_i32_1 = arith.constant 0 : i32
    return %c0_i32, %c0_i32_0 : i32, i32
  }
  func.func @transform_5(%arg0: i32) -> (i32, i32) {
    %c0_i32 = arith.constant 0 : i32
    %c0_i32_0 = arith.constant 0 : i32
    %c0_i32_1 = arith.constant 0 : i32
    return %c0_i32, %c0_i32_0 : i32, i32
  }
  func.func @transform_6(%arg0: i32) -> i32 {
    %c0_i32 = arith.constant 0 : i32
    %c0_i32_0 = arith.constant 0 : i32
    return %c0_i32 : i32
  }
  func.func @transform_7(%arg0: i32) -> (i32, i32) {
    %c0_i32 = arith.constant 0 : i32
    %c0_i32_0 = arith.constant 0 : i32
    return %arg0, %c0_i32 : i32, i32
  }
}

</mosaic_0001>

<llo_original>
// kernel: tpu_custom_call.1
$region0: #{tpu_custom_call.1}
  #allocation0 [shape = 'u32[]', space=smem, size = 0x4, offset = 0x4, fixed_abs, tag = 'smem constant byte address 0x4 - core index']
  #allocation1 [shape = 'u32[144,128]{1,0:T(1,128)}', space=vmem, size = 0x12000, scoped, tag = 'internal scratch']
  #allocation2 [shape = 'f32[1]{0:T(128)S(6)}', space=smem, size = 0x200, scoped, tag = 'scoped memory for tpu_custom_call.1']
  %s0 = inlined_call_operand.vmem [shape: f32[200,32], index: 0, kind: input, shape index: {}]
  %s1 = inlined_call_operand.vmem [shape: f32[200,32], index: 1, kind: input, shape index: {}]
  %s2 = inlined_call_operand.vmem [shape: f32[32,32], index: 2, kind: input, shape index: {}]
  %s3 = inlined_call_operand.vmem [shape: f32[32,32], index: 3, kind: input, shape index: {}]
  %s4 = inlined_call_operand.vmem [shape: f32[1,32], index: 4, kind: input, shape index: {}]
  %s5 = inlined_call_operand.vmem [shape: f32[1,32], index: 5, kind: input, shape index: {}]
  %s6 = inlined_call_operand.<no memory space> [shape: f32[1], index: 6, kind: input, shape index: {}]
  %s7 = inlined_call_operand.vmem [shape: f32[200,1], index: 7, kind: output, shape index: {}]
  %s8 = sld [smem:[#allocation0]]
  $region109: #{tpu_custom_call.1} parent=0
    _
  %s10 = ssub.s32 1, %s8
  %s11 = scalar_select 0, %s10, %s8
  %12 = sst [smem:[#allocation2]] %s6
  $region1: #{tpu_custom_call.1} parent=0
    #allocation3 [shape = 'u8[131072]{0}', space=vmem, size = 0x20000, scoped, tag = 'output window, operand 0']
    loop: start=0, step=1, limit=4
    $region2: #{tpu_custom_call.1} parent=1 // loop_pre_header
      _
    $region3: #{tpu_custom_call.1} parent=1 // loop_header
      %s14 = sphi 0, %s18
      %p15 = scmp.ge.s32.totalorder %s14, 4
      %s24 = sphi 0, %s26
      %s27 = sphi 0, %s24
      %s28 = sphi 0, %s27
      %s44 = sphi 0, %s28
      %s50 = sphi 0, %s52
      %s53 = sphi 0, %s50
      %s54 = sphi 0, %s53
      %s70 = sphi 0, %s54
      %s74 = sphi 0, %s74
      %s76 = sphi 0, %s74
      %s77 = sphi 0, %s76
      %s91 = sphi 0, %s77
      %s95 = sphi 0, %s95
      %s97 = sphi 0, %s95
      %s98 = sphi 0, %s97
      %s112 = sphi 0, %s98
      %s116 = sphi 0, %s116
      %s118 = sphi 0, %s116
      %s119 = sphi 0, %s118
      %s133 = sphi 0, %s119
      %s137 = sphi 0, %s137
      %s139 = sphi 0, %s137
      %s140 = sphi 0, %s139
      %s154 = sphi 0, %s140
      %s158 = sphi 0, %s158
      %s160 = sphi 0, %s158
      %s161 = sphi 0, %s160
      %s175 = sphi 0, %s161
      %s181 = sphi 0, %s183
      %s184 = sphi 0, %s181
      %s185 = sphi 0, %s184
      %s201 = sphi 0, %s185
    $region4: #{tpu_custom_call.1} parent=1 // loop_header_branch
      %17 = sbr.rel (%p15) target = $region8
    $region5: #{tpu_custom_call.1} parent=1 // loop_body
      %s19 = ssub.s32 %s14, 1
      %s20 = ssub.s32 %s14, 2
      %s21 = sadd.s32 %s14, 1
      %s22 = ssub.s32 %s14, %s21
      %p23 = scmp.eq.s32.totalorder %s22, 0
      %s25 = sadd.s32 %s24, 1
      %s26 = scalar_select %p23, %s24, %s25
      %p29 = pneg %p23
      %p30 = scmp.eq.s32.totalorder %s14, 1
      %p31 = por %p29, %p30
      %p32 = scmp.ne.s32.totalorder %s24, %s27
      %p33 = scmp.eq.s32.totalorder %s14, 0
      %p34 = por %p32, %p33
      %p35 = scmp.ne.s32.totalorder %s24, %s27
      %p36 = scmp.eq.s32.totalorder %s19, 1
      %p37 = por %p35, %p36
      %p38 = scmp.ne.s32.totalorder %s27, %s28
      %p39 = scmp.eq.s32.totalorder %s19, 0
      %p40 = por %p38, %p39
      %p41 = scmp.ne.s32.totalorder %s27, %s28
      %p42 = scmp.eq.s32.totalorder %s20, 1
      %p43 = por %p41, %p42
      %p45 = scmp.ne.s32.totalorder %s28, %s44
      %p46 = scmp.eq.s32.totalorder %s20, 0
      %p47 = por %p45, %p46
      %s48 = ssub.s32 %s14, %s21
      %p49 = scmp.eq.s32.totalorder %s48, 0
      %s51 = sadd.s32 %s50, 1
      %s52 = scalar_select %p49, %s50, %s51
      %p55 = pneg %p49
      %p56 = scmp.eq.s32.totalorder %s14, 1
      %p57 = por %p55, %p56
      %p58 = scmp.ne.s32.totalorder %s50, %s53
      %p59 = scmp.eq.s32.totalorder %s14, 0
      %p60 = por %p58, %p59
      %p61 = scmp.ne.s32.totalorder %s50, %s53
      %p62 = scmp.eq.s32.totalorder %s19, 1
      %p63 = por %p61, %p62
      %p64 = scmp.ne.s32.totalorder %s53, %s54
      %p65 = scmp.eq.s32.totalorder %s19, 0
      %p66 = por %p64, %p65
      %p67 = scmp.ne.s32.totalorder %s53, %s54
      %p68 = scmp.eq.s32.totalorder %s20, 1
      %p69 = por %p67, %p68
      %p71 = scmp.ne.s32.totalorder %s54, %s70
      %p72 = scmp.eq.s32.totalorder %s20, 0
      %p73 = por %p71, %p72
      %s75 = sadd.s32 %s74, 1
      %p78 = scmp.eq.s32.totalorder %s14, 1
      %p79 = scmp.ne.s32.totalorder %s74, %s76
      %p80 = scmp.eq.s32.totalorder %s14, 0
      %p81 = por %p79, %p80
      %p82 = scmp.ne.s32.totalorder %s74, %s76
      %p83 = scmp.eq.s32.totalorder %s19, 1
      %p84 = por %p82, %p83
      %p85 = scmp.ne.s32.totalorder %s76, %s77
      %p86 = scmp.eq.s32.totalorder %s19, 0
      %p87 = por %p85, %p86
      %p88 = scmp.ne.s32.totalorder %s76, %s77
      %p89 = scmp.eq.s32.totalorder %s20, 1
      %p90 = por %p88, %p89
      %p92 = scmp.ne.s32.totalorder %s77, %s91
      %p93 = scmp.eq.s32.totalorder %s20, 0
      %p94 = por %p92, %p93
      %s96 = sadd.s32 %s95, 1
      %p99 = scmp.eq.s32.totalorder %s14, 1
      %p100 = scmp.ne.s32.totalorder %s95, %s97
      %p101 = scmp.eq.s32.totalorder %s14, 0
      %p102 = por %p100, %p101
      %p103 = scmp.ne.s32.totalorder %s95, %s97
      %p104 = scmp.eq.s32.totalorder %s19, 1
      %p105 = por %p103, %p104
      %p106 = scmp.ne.s32.totalorder %s97, %s98
      %p107 = scmp.eq.s32.totalorder %s19, 0
      %p108 = por %p106, %p107
      %p109 = scmp.ne.s32.totalorder %s97, %s98
      %p110 = scmp.eq.s32.totalorder %s20, 1
      %p111 = por %p109, %p110
      %p113 = scmp.ne.s32.totalorder %s98, %s112
      %p114 = scmp.eq.s32.totalorder %s20, 0
      %p115 = por %p113, %p114
      %s117 = sadd.s32 %s116, 1
      %p120 = scmp.eq.s32.totalorder %s14, 1
      %p121 = scmp.ne.s32.totalorder %s116, %s118
      %p122 = scmp.eq.s32.totalorder %s14, 0
      %p123 = por %p121, %p122
      %p124 = scmp.ne.s32.totalorder %s116, %s118
      %p125 = scmp.eq.s32.totalorder %s19, 1
      %p126 = por %p124, %p125
      %p127 = scmp.ne.s32.totalorder %s118, %s119
      %p128 = scmp.eq.s32.totalorder %s19, 0
      %p129 = por %p127, %p128
      %p130 = scmp.ne.s32.totalorder %s118, %s119
      %p131 = scmp.eq.s32.totalorder %s20, 1
      %p132 = por %p130, %p131
      %p134 = scmp.ne.s32.totalorder %s119, %s133
      %p135 = scmp.eq.s32.totalorder %s20, 0
      %p136 = por %p134, %p135
      %s138 = sadd.s32 %s137, 1
      %p141 = scmp.eq.s32.totalorder %s14, 1
      %p142 = scmp.ne.s32.totalorder %s137, %s139
      %p143 = scmp.eq.s32.totalorder %s14, 0
      %p144 = por %p142, %p143
      %p145 = scmp.ne.s32.totalorder %s137, %s139
      %p146 = scmp.eq.s32.totalorder %s19, 1
      %p147 = por %p145, %p146
      %p148 = scmp.ne.s32.totalorder %s139, %s140
      %p149 = scmp.eq.s32.totalorder %s19, 0
      %p150 = por %p148, %p149
      %p151 = scmp.ne.s32.totalorder %s139, %s140
      %p152 = scmp.eq.s32.totalorder %s20, 1
      %p153 = por %p151, %p152
      %p155 = scmp.ne.s32.totalorder %s140, %s154
      %p156 = scmp.eq.s32.totalorder %s20, 0
      %p157 = por %p155, %p156
      %s159 = sadd.s32 %s158, 1
      %p162 = scmp.eq.s32.totalorder %s14, 1
      %p163 = scmp.ne.s32.totalorder %s158, %s160
      %p164 = scmp.eq.s32.totalorder %s14, 0
      %p165 = por %p163, %p164
      %p166 = scmp.ne.s32.totalorder %s158, %s160
      %p167 = scmp.eq.s32.totalorder %s19, 1
      %p168 = por %p166, %p167
      %p169 = scmp.ne.s32.totalorder %s160, %s161
      %p170 = scmp.eq.s32.totalorder %s19, 0
      %p171 = por %p169, %p170
      %p172 = scmp.ne.s32.totalorder %s160, %s161
      %p173 = scmp.eq.s32.totalorder %s20, 1
      %p174 = por %p172, %p173
      %p176 = scmp.ne.s32.totalorder %s161, %s175
      %p177 = scmp.eq.s32.totalorder %s20, 0
      %p178 = por %p176, %p177
      %s179 = ssub.s32 %s14, %s21
      %p180 = scmp.eq.s32.totalorder %s179, 0
      %s182 = sadd.s32 %s181, 1
      %s183 = scalar_select %p180, %s181, %s182
      %p186 = pneg %p180
      %p187 = scmp.eq.s32.totalorder %s14, 1
      %p188 = por %p186, %p187
      %p189 = scmp.ne.s32.totalorder %s181, %s184
      %p190 = scmp.eq.s32.totalorder %s14, 0
      %p191 = por %p189, %p190
      %p192 = scmp.ne.s32.totalorder %s181, %s184
      %p193 = scmp.eq.s32.totalorder %s19, 1
      %p194 = por %p192, %p193
      %p195 = scmp.ne.s32.totalorder %s184, %s185
      %p196 = scmp.eq.s32.totalorder %s19, 0
      %p197 = por %p195, %p196
      %p198 = scmp.ne.s32.totalorder %s184, %s185
      %p199 = scmp.eq.s32.totalorder %s20, 1
      %p200 = por %p198, %p199
      %p202 = scmp.ne.s32.totalorder %s185, %s201
      %p203 = scmp.eq.s32.totalorder %s20, 0
      %p204 = por %p202, %p203
      %p205 = scmp.le.s32.totalorder 1, %s14
      %p206 = scmp.lt.s32.totalorder %s14, 3
      %p207 = pnand %p205, %p206
      %p208 = pneg %p207
      // Predicated region
      $region9: #{tpu_custom_call.1} parent=5 // pred_check
        _
      $region10: #{tpu_custom_call.1} parent=5 // pred_check_branch
        %210 = sbr.rel (%p207) target = $region12
      $region11: #{tpu_custom_call.1} parent=5 // pred_region
        %s211 = ssub.s32 %s14, 1
        // Predicated region
        $region13: #{tpu_custom_call.1} parent=11 // pred_check
          %p212 = pneg %p87
        $region14: #{tpu_custom_call.1} parent=11 // pred_check_branch
          %214 = sbr.rel (%p212) target = $region16
        $region15: #{tpu_custom_call.1} parent=11 // pred_region
          _
        $region16: #{tpu_custom_call.1} parent=11 // pred_fallthru
          _
        // Predicated region
        $region17: #{tpu_custom_call.1} parent=11 // pred_check
          %p215 = pneg %p108
        $region18: #{tpu_custom_call.1} parent=11 // pred_check_branch
          %217 = sbr.rel (%p215) target = $region20
        $region19: #{tpu_custom_call.1} parent=11 // pred_region
          _
        $region20: #{tpu_custom_call.1} parent=11 // pred_fallthru
          _
        // Predicated region
        $region21: #{tpu_custom_call.1} parent=11 // pred_check
          %p218 = pneg %p129
        $region22: #{tpu_custom_call.1} parent=11 // pred_check_branch
          %220 = sbr.rel (%p218) target = $region24
        $region23: #{tpu_custom_call.1} parent=11 // pred_region
          _
        $region24: #{tpu_custom_call.1} parent=11 // pred_fallthru
          _
        // Predicated region
        $region25: #{tpu_custom_call.1} parent=11 // pred_check
          %p221 = pneg %p150
        $region26: #{tpu_custom_call.1} parent=11 // pred_check_branch
          %223 = sbr.rel (%p221) target = $region28
        $region27: #{tpu_custom_call.1} parent=11 // pred_region
          _
        $region28: #{tpu_custom_call.1} parent=11 // pred_fallthru
          _
        // Predicated region
        $region29: #{tpu_custom_call.1} parent=11 // pred_check
          %p224 = pneg %p171
        $region30: #{tpu_custom_call.1} parent=11 // pred_check_branch
          %226 = sbr.rel (%p224) target = $region32
        $region31: #{tpu_custom_call.1} parent=11 // pred_region
          _
        $region32: #{tpu_custom_call.1} parent=11 // pred_fallthru
          _
      $region12: #{tpu_custom_call.1} parent=5 // pred_fallthru
        _
      %p227 = scmp.lt.s32.totalorder %s14, 2
      // Predicated region
      $region33: #{tpu_custom_call.1} parent=5 // pred_check
        %p228 = pneg %p227
      $region34: #{tpu_custom_call.1} parent=5 // pred_check_branch
        %230 = sbr.rel (%p228) target = $region36
      $region35: #{tpu_custom_call.1} parent=5 // pred_region
        // Predicated region
        $region37: #{tpu_custom_call.1} parent=35 // pred_check
          %p231 = pneg %p34
        $region38: #{tpu_custom_call.1} parent=35 // pred_check_branch
          %233 = sbr.rel (%p231) target = $region40
        $region39: #{tpu_custom_call.1} parent=35 // pred_region
          %s234 = smul.u32 16, %s14
          %s235 = ssub.s32 25, %s234
          %p236 = scmp.lt.s32.totalorder %s235, 16
          %s237 = scalar_select %p236, %s235, 16
          %s238 = smul.u32 128, %s237
          %p239 = scmp.lt.s32.totalorder %s234, 24
          %s240 = scalar_select %p239, %s234, 24
          %s241 = smul.addr %s240, 8
          %s242 = scalar_lea.vmem %s0, %s241
          %s243 = smul.u32 16, %s14
          %s244 = ssub.s32 25, %s243
          %p245 = scmp.lt.s32.totalorder %s244, 16
          %s246 = scalar_select %p245, %s244, 16
          %s247 = smul.u32 128, %s246
        $region40: #{tpu_custom_call.1} parent=35 // pred_fallthru
          _
        // Predicated region
        $region41: #{tpu_custom_call.1} parent=35 // pred_check
          %p248 = pneg %p60
        $region42: #{tpu_custom_call.1} parent=35 // pred_check_branch
          %250 = sbr.rel (%p248) target = $region44
        $region43: #{tpu_custom_call.1} parent=35 // pred_region
          %s251 = smul.u32 16, %s14
          %s252 = ssub.s32 25, %s251
          %p253 = scmp.lt.s32.totalorder %s252, 16
          %s254 = scalar_select %p253, %s252, 16
          %s255 = smul.u32 128, %s254
          %p256 = scmp.lt.s32.totalorder %s251, 24
          %s257 = scalar_select %p256, %s251, 24
          %s258 = smul.addr %s257, 8
          %s259 = scalar_lea.vmem %s1, %s258
          %s260 = smul.u32 16, %s14
          %s261 = ssub.s32 25, %s260
          %p262 = scmp.lt.s32.totalorder %s261, 16
          %s263 = scalar_select %p262, %s261, 16
          %s264 = smul.u32 128, %s263
        $region44: #{tpu_custom_call.1} parent=35 // pred_fallthru
          _
      $region36: #{tpu_custom_call.1} parent=5 // pred_fallthru
        _
      %p265 = scmp.le.s32.totalorder 1, %s14
      %p266 = scmp.lt.s32.totalorder %s14, 3
      %p267 = pnand %p265, %p266
      %p268 = pneg %p267
      // Predicated region
      $region45: #{tpu_custom_call.1} parent=5 // pred_check
        _
      $region46: #{tpu_custom_call.1} parent=5 // pred_check_branch
        %270 = sbr.rel (%p267) target = $region48
      $region47: #{tpu_custom_call.1} parent=5 // pred_region
        %s271 = ssub.s32 %s14, 1
        %s272 = smul.u32 16, %s19
        %s273 = ssub.s32 25, %s272
        %p274 = scmp.lt.s32.totalorder %s273, 16
        %s275 = scalar_select %p274, %s273, 16
        %s276 = smul.u32 128, %s275
        %p277 = scmp.lt.s32.totalorder %s272, 24
        %s278 = scalar_select %p277, %s272, 24
        %s279 = smul.addr %s278, 8
        %s280 = scalar_lea.vmem %s0, %s279
        %p281 = pneg %p40
        %p282 = pneg %p37
        %s283 = smul.u32 16, %s19
        %s284 = ssub.s32 25, %s283
        %p285 = scmp.lt.s32.totalorder %s284, 16
        %s286 = scalar_select %p285, %s284, 16
        %s287 = smul.u32 128, %s286
        %p288 = scmp.lt.s32.totalorder %s283, 24
        %s289 = scalar_select %p288, %s283, 24
        %s290 = smul.addr %s289, 8
        %s291 = scalar_lea.vmem %s1, %s290
        %p292 = pneg %p66
        %p293 = pneg %p63
        %p294 = pneg %p87
        %p295 = pneg %p84
        %p296 = pneg %p108
        %p297 = pneg %p105
        %p298 = pneg %p129
        %p299 = pneg %p126
        %p300 = pneg %p150
        %p301 = pneg %p147
        %p302 = pneg %p171
        %p303 = pneg %p168
        %p304 = pneg %p197
        %p305 = pneg %p194
        %s306 = sand.u32 %s184, 1
        %s307 = sand.u32 %s184, 1
        %s308 = smul.addr %s307, 128
        %s309 = scalar_lea.vmem [#allocation3], %s308
        %s310 = smul.u32 16, %s19
        %s311 = ssub.s32 25, %s310
        %p312 = scmp.lt.s32.totalorder %s311, 16
        %s313 = scalar_select %p312, %s311, 16
        %s314 = smul.u32 128, %s313
        %p315 = scmp.lt.s32.totalorder %s310, 24
        %s316 = scalar_select %p315, %s310, 24
        %s317 = smul.addr %s316, 8
        %s318 = scalar_lea.vmem %s0, %s317
        %s319 = smul.u32 16, %s19
        %s320 = ssub.s32 25, %s319
        %p321 = scmp.lt.s32.totalorder %s320, 16
        %s322 = scalar_select %p321, %s320, 16
        %s323 = smul.u32 128, %s322
        %s324 = smul.u32 16, %s19
        %s325 = ssub.s32 25, %s324
        %p326 = scmp.lt.s32.totalorder %s325, 16
        %s327 = scalar_select %p326, %s325, 16
        %s328 = smul.u32 128, %s327
        %p329 = scmp.lt.s32.totalorder %s324, 24
        %s330 = scalar_select %p329, %s324, 24
        %s331 = smul.addr %s330, 8
        %s332 = scalar_lea.vmem %s1, %s331
        %s333 = smul.u32 16, %s19
        %s334 = ssub.s32 25, %s333
        %p335 = scmp.lt.s32.totalorder %s334, 16
        %s336 = scalar_select %p335, %s334, 16
        %s337 = smul.u32 128, %s336
        %s338 = smul.u32 16, %s19
        %s339 = ssub.s32 25, %s338
        %p340 = scmp.lt.s32.totalorder %s339, 16
        %s341 = scalar_select %p340, %s339, 16
        %s342 = smul.u32 128, %s341
        %v343 = vld [vmem:[%s318] sm:$0xff]
        %v344 = vld [vmem:[%s318 + $0x8] sm:$0xff]
        %v345 = vld [vmem:[%s318 + $0x10] sm:$0xff]
        %v346 = vld [vmem:[%s318 + $0x18] sm:$0xff]
        %v347 = vld [vmem:[%s318 + $0x20] sm:$0xff]
        %v348 = vld [vmem:[%s318 + $0x28] sm:$0xff]
        %v349 = vld [vmem:[%s318 + $0x30] sm:$0xff]
        %v350 = vld [vmem:[%s318 + $0x38] sm:$0xff]
        %v351 = vld [vmem:[%s318 + $0x40] sm:$0xff]
        %v352 = vld [vmem:[%s318 + $0x48] sm:$0xff]
        %v353 = vld [vmem:[%s318 + $0x50] sm:$0xff]
        %v354 = vld [vmem:[%s318 + $0x58] sm:$0xff]
        %v355 = vld [vmem:[%s318 + $0x60] sm:$0xff]
        %v356 = vld [vmem:[%s318 + $0x68] sm:$0xff]
        %v357 = vld [vmem:[%s318 + $0x70] sm:$0xff]
        %v358 = vld [vmem:[%s318 + $0x78] sm:$0xff]
        %v359 = vld [vmem:[%s332] sm:$0xff]
        %v360 = vld [vmem:[%s332 + $0x8] sm:$0xff]
        %v361 = vld [vmem:[%s332 + $0x10] sm:$0xff]
        %v362 = vld [vmem:[%s332 + $0x18] sm:$0xff]
        %v363 = vld [vmem:[%s332 + $0x20] sm:$0xff]
        %v364 = vld [vmem:[%s332 + $0x28] sm:$0xff]
        %v365 = vld [vmem:[%s332 + $0x30] sm:$0xff]
        %v366 = vld [vmem:[%s332 + $0x38] sm:$0xff]
        %v367 = vld [vmem:[%s332 + $0x40] sm:$0xff]
        %v368 = vld [vmem:[%s332 + $0x48] sm:$0xff]
        %v369 = vld [vmem:[%s332 + $0x50] sm:$0xff]
        %v370 = vld [vmem:[%s332 + $0x58] sm:$0xff]
        %v371 = vld [vmem:[%s332 + $0x60] sm:$0xff]
        %v372 = vld [vmem:[%s332 + $0x68] sm:$0xff]
        %v373 = vld [vmem:[%s332 + $0x70] sm:$0xff]
        %v374 = vld [vmem:[%s332 + $0x78] sm:$0xff]
        %v375 = vld [vmem:[%s2] sm:$0xff]
        %v376 = vld [vmem:[%s2 + $0x8] sm:$0xff]
        %v377 = vld [vmem:[%s2 + $0x10] sm:$0xff]
        %v378 = vld [vmem:[%s2 + $0x18] sm:$0xff]
        %v379 = vld [vmem:[%s3] sm:$0xff]
        %v380 = vld [vmem:[%s3 + $0x8] sm:$0xff]
        %v381 = vld [vmem:[%s3 + $0x10] sm:$0xff]
        %v382 = vld [vmem:[%s3 + $0x18] sm:$0xff]
        %vm383 = vcmask 261120
        %v385 = vsel %vm383, %v359, 0
        %v388 = vsel %vm383, %v360, 0
        %v391 = vsel %vm383, %v361, 0
        %v394 = vsel %vm383, %v362, 0
        %v397 = vsel %vm383, %v363, 0
        %v400 = vsel %vm383, %v364, 0
        %v403 = vsel %vm383, %v365, 0
        %v406 = vsel %vm383, %v366, 0
        %v409 = vsel %vm383, %v367, 0
        %v412 = vsel %vm383, %v368, 0
        %v415 = vsel %vm383, %v369, 0
        %v418 = vsel %vm383, %v370, 0
        %v421 = vsel %vm383, %v371, 0
        %v424 = vsel %vm383, %v372, 0
        %v427 = vsel %vm383, %v373, 0
        %v430 = vsel %vm383, %v374, 0
        %432 = vmatprep.subr.mxu0 0.0
        %433 = vmatpush1.msra.mxu0 0.0
        %434 = vmatprep.subr.mxu0 0.0
        %435 = vmatpush1.msra.mxu0 0.0
        %436 = vmatprep.subr.mxu0 0.0
        %437 = vmatpush1.msra.mxu0 0.0
        %438 = vmatprep.subr.mxu0 0.0
        %439 = vmatpush1.msra.mxu0 0.0
        %440 = vmatprep.subr.mxu0 0.0
        %441 = vmatpush1.msra.mxu0 0.0
        %442 = vmatprep.subr.mxu0 0.0
        %443 = vmatpush1.msra.mxu0 0.0
        %444 = vmatprep.subr.mxu0 0.0
        %445 = vmatpush1.msra.mxu0 0.0
        %446 = vmatprep.subr.mxu0 0.0
        %447 = vmatpush1.msra.mxu0 0.0
        %448 = vmatprep.subr.mxu0 0.0
        %449 = vmatpush1.msra.mxu0 0.0
        %450 = vmatprep.subr.mxu0 0.0
        %451 = vmatpush1.msra.mxu0 0.0
        %452 = vmatprep.subr.mxu0 0.0
        %453 = vmatpush1.msra.mxu0 0.0
        %454 = vmatprep.subr.mxu0 0.0
        %455 = vmatpush1.msra.mxu0 0.0
        %456 = vmatprep.subr.mxu0 0.0
        %457 = vmatpush1.msra.mxu0 %v382
        %458 = vmatprep.subr.mxu0 0.0
        %459 = vmatpush1.msra.mxu0 %v381
        %460 = vmatprep.subr.mxu0 0.0
        %461 = vmatpush1.msra.mxu0 %v380
        %462 = vmatprep.subr.mxu0 0.0
        %463 = vmatpush1.msra.mxu0 %v379
        %464 = vmatprep.subr.mxu0 0.0
        %465 = vmatpush2.msra.mxu0 0.0
        %466 = vmatprep.subr.mxu0 0.0
        %467 = vmatpush2.msra.mxu0 0.0
        %468 = vmatprep.subr.mxu0 0.0
        %469 = vmatpush2.msra.mxu0 0.0
        %470 = vmatprep.subr.mxu0 0.0
        %471 = vmatpush2.msra.mxu0 0.0
        %472 = vmatprep.subr.mxu0 0.0
        %473 = vmatpush2.msra.mxu0 0.0
        %474 = vmatprep.subr.mxu0 0.0
        %475 = vmatpush2.msra.mxu0 0.0
        %476 = vmatprep.subr.mxu0 0.0
        %477 = vmatpush2.msra.mxu0 0.0
        %478 = vmatprep.subr.mxu0 0.0
        %479 = vmatpush2.msra.mxu0 0.0
        %480 = vmatprep.subr.mxu0 0.0
        %481 = vmatpush2.msra.mxu0 0.0
        %482 = vmatprep.subr.mxu0 0.0
        %483 = vmatpush2.msra.mxu0 0.0
        %484 = vmatprep.subr.mxu0 0.0
        %485 = vmatpush2.msra.mxu0 0.0
        %486 = vmatprep.subr.mxu0 0.0
        %487 = vmatpush2.msra.mxu0 0.0
        %488 = vmatprep.subr.mxu0 0.0
        %489 = vmatpush2.msra.mxu0 0.0
        %490 = vmatprep.subr.mxu0 0.0
        %491 = vmatpush2.msra.mxu0 0.0
        %492 = vmatprep.subr.mxu0 0.0
        %493 = vmatpush2.msra.mxu0 0.0
        %494 = vmatprep.subr.mxu0 0.0
        %495 = vmatpush2.msra.mxu0 0.0
        %496 = vmatprep.mubr.f32.mxu0 0.0
        %497 = vmatmul.mubr.f32.gmra.mxu0 %v385
        %v498 = vpop.f32.mrf.mxu0
        %v499 = vadd.f32 0.0, %v498
        %v500 = vpop.f32.mrf.mxu0
        %501 = vmatprep.mubr.f32.mxu0 0.0
        %502 = vmatmul.mubr.f32.gmra.mxu0 %v388
        %v503 = vpop.f32.mrf.mxu0
        %v504 = vadd.f32 0.0, %v503
        %v505 = vpop.f32.mrf.mxu0
        %506 = vmatprep.mubr.f32.mxu0 0.0
        %507 = vmatmul.mubr.f32.gmra.mxu0 %v391
        %v508 = vpop.f32.mrf.mxu0
        %v509 = vadd.f32 0.0, %v508
        %v510 = vpop.f32.mrf.mxu0
        %511 = vmatprep.mubr.f32.mxu0 0.0
        %512 = vmatmul.mubr.f32.gmra.mxu0 %v394
        %v513 = vpop.f32.mrf.mxu0
        %v514 = vadd.f32 0.0, %v513
        %v515 = vpop.f32.mrf.mxu0
        %516 = vmatprep.mubr.f32.mxu0 0.0
        %517 = vmatmul.mubr.f32.gmra.mxu0 %v397
        %v518 = vpop.f32.mrf.mxu0
        %v519 = vadd.f32 0.0, %v518
        %v520 = vpop.f32.mrf.mxu0
        %521 = vmatprep.mubr.f32.mxu0 0.0
        %522 = vmatmul.mubr.f32.gmra.mxu0 %v400
        %v523 = vpop.f32.mrf.mxu0
        %v524 = vadd.f32 0.0, %v523
        %v525 = vpop.f32.mrf.mxu0
        %526 = vmatprep.mubr.f32.mxu0 0.0
        %527 = vmatmul.mubr.f32.gmra.mxu0 %v403
        %v528 = vpop.f32.mrf.mxu0
        %v529 = vadd.f32 0.0, %v528
        %v530 = vpop.f32.mrf.mxu0
        %531 = vmatprep.mubr.f32.mxu0 0.0
        %532 = vmatmul.mubr.f32.gmra.mxu0 %v406
        %v533 = vpop.f32.mrf.mxu0
        %v534 = vadd.f32 0.0, %v533
        %v535 = vpop.f32.mrf.mxu0
        %536 = vmatprep.mubr.f32.mxu0 0.0
        %537 = vmatmul.mubr.f32.gmra.mxu0 %v409
        %v538 = vpop.f32.mrf.mxu0
        %v539 = vadd.f32 0.0, %v538
        %v540 = vpop.f32.mrf.mxu0
        %541 = vmatprep.mubr.f32.mxu0 0.0
        %542 = vmatmul.mubr.f32.gmra.mxu0 %v412
        %v543 = vpop.f32.mrf.mxu0
        %v544 = vadd.f32 0.0, %v543
        %v545 = vpop.f32.mrf.mxu0
        %546 = vmatprep.mubr.f32.mxu0 0.0
        %547 = vmatmul.mubr.f32.gmra.mxu0 %v415
        %v548 = vpop.f32.mrf.mxu0
        %v549 = vadd.f32 0.0, %v548
        %v550 = vpop.f32.mrf.mxu0
        %551 = vmatprep.mubr.f32.mxu0 0.0
        %552 = vmatmul.mubr.f32.gmra.mxu0 %v418
        %v553 = vpop.f32.mrf.mxu0
        %v554 = vadd.f32 0.0, %v553
        %v555 = vpop.f32.mrf.mxu0
        %556 = vmatprep.mubr.f32.mxu0 0.0
        %557 = vmatmul.mubr.f32.gmra.mxu0 %v421
        %v558 = vpop.f32.mrf.mxu0
        %v559 = vadd.f32 0.0, %v558
        %v560 = vpop.f32.mrf.mxu0
        %561 = vmatprep.mubr.f32.mxu0 0.0
        %562 = vmatmul.mubr.f32.gmra.mxu0 %v424
        %v563 = vpop.f32.mrf.mxu0
        %v564 = vadd.f32 0.0, %v563
        %v565 = vpop.f32.mrf.mxu0
        %566 = vmatprep.mubr.f32.mxu0 0.0
        %567 = vmatmul.mubr.f32.gmra.mxu0 %v427
        %v568 = vpop.f32.mrf.mxu0
        %v569 = vadd.f32 0.0, %v568
        %v570 = vpop.f32.mrf.mxu0
        %571 = vmatprep.mubr.f32.mxu0 0.0
        %572 = vmatmul.mubr.f32.gmra.mxu0 %v430
        %v573 = vpop.f32.mrf.mxu0
        %v574 = vadd.f32 0.0, %v573
        %v575 = vpop.f32.mrf.mxu0
        %576 = vdwg.mxu0
        %v578 = vsel %vm383, %v343, 0
        %v581 = vsel %vm383, %v344, 0
        %v584 = vsel %vm383, %v345, 0
        %v587 = vsel %vm383, %v346, 0
        %v590 = vsel %vm383, %v347, 0
        %v593 = vsel %vm383, %v348, 0
        %v596 = vsel %vm383, %v349, 0
        %v599 = vsel %vm383, %v350, 0
        %v602 = vsel %vm383, %v351, 0
        %v605 = vsel %vm383, %v352, 0
        %v608 = vsel %vm383, %v353, 0
        %v611 = vsel %vm383, %v354, 0
        %v614 = vsel %vm383, %v355, 0
        %v617 = vsel %vm383, %v356, 0
        %v620 = vsel %vm383, %v357, 0
        %v623 = vsel %vm383, %v358, 0
        %625 = vmatprep.subr.mxu0 0.0
        %626 = vmatpush1.msra.mxu0 0.0
        %627 = vmatprep.subr.mxu0 0.0
        %628 = vmatpush1.msra.mxu0 0.0
        %629 = vmatprep.subr.mxu0 0.0
        %630 = vmatpush1.msra.mxu0 0.0
        %631 = vmatprep.subr.mxu0 0.0
        %632 = vmatpush1.msra.mxu0 0.0
        %633 = vmatprep.subr.mxu0 0.0
        %634 = vmatpush1.msra.mxu0 0.0
        %635 = vmatprep.subr.mxu0 0.0
        %636 = vmatpush1.msra.mxu0 0.0
        %637 = vmatprep.subr.mxu0 0.0
        %638 = vmatpush1.msra.mxu0 0.0
        %639 = vmatprep.subr.mxu0 0.0
        %640 = vmatpush1.msra.mxu0 0.0
        %641 = vmatprep.subr.mxu0 0.0
        %642 = vmatpush1.msra.mxu0 0.0
        %643 = vmatprep.subr.mxu0 0.0
        %644 = vmatpush1.msra.mxu0 0.0
        %645 = vmatprep.subr.mxu0 0.0
        %646 = vmatpush1.msra.mxu0 0.0
        %647 = vmatprep.subr.mxu0 0.0
        %648 = vmatpush1.msra.mxu0 0.0
        %649 = vmatprep.subr.mxu0 0.0
        %650 = vmatpush1.msra.mxu0 %v378
        %651 = vmatprep.subr.mxu0 0.0
        %652 = vmatpush1.msra.mxu0 %v377
        %653 = vmatprep.subr.mxu0 0.0
        %654 = vmatpush1.msra.mxu0 %v376
        %655 = vmatprep.subr.mxu0 0.0
        %656 = vmatpush1.msra.mxu0 %v375
        %657 = vmatprep.subr.mxu0 0.0
        %658 = vmatpush2.msra.mxu0 0.0
        %659 = vmatprep.subr.mxu0 0.0
        %660 = vmatpush2.msra.mxu0 0.0
        %661 = vmatprep.subr.mxu0 0.0
        %662 = vmatpush2.msra.mxu0 0.0
        %663 = vmatprep.subr.mxu0 0.0
        %664 = vmatpush2.msra.mxu0 0.0
        %665 = vmatprep.subr.mxu0 0.0
        %666 = vmatpush2.msra.mxu0 0.0
        %667 = vmatprep.subr.mxu0 0.0
        %668 = vmatpush2.msra.mxu0 0.0
        %669 = vmatprep.subr.mxu0 0.0
        %670 = vmatpush2.msra.mxu0 0.0
        %671 = vmatprep.subr.mxu0 0.0
        %672 = vmatpush2.msra.mxu0 0.0
        %673 = vmatprep.subr.mxu0 0.0
        %674 = vmatpush2.msra.mxu0 0.0
        %675 = vmatprep.subr.mxu0 0.0
        %676 = vmatpush2.msra.mxu0 0.0
        %677 = vmatprep.subr.mxu0 0.0
        %678 = vmatpush2.msra.mxu0 0.0
        %679 = vmatprep.subr.mxu0 0.0
        %680 = vmatpush2.msra.mxu0 0.0
        %681 = vmatprep.subr.mxu0 0.0
        %682 = vmatpush2.msra.mxu0 0.0
        %683 = vmatprep.subr.mxu0 0.0
        %684 = vmatpush2.msra.mxu0 0.0
        %685 = vmatprep.subr.mxu0 0.0
        %686 = vmatpush2.msra.mxu0 0.0
        %687 = vmatprep.subr.mxu0 0.0
        %688 = vmatpush2.msra.mxu0 0.0
        %689 = vmatprep.mubr.f32.mxu0 0.0
        %690 = vmatmul.mubr.f32.gmra.mxu0 %v578
        %v691 = vpop.f32.mrf.mxu0
        %v692 = vadd.f32 %v499, %v691
        %v693 = vpop.f32.mrf.mxu0
        %694 = vmatprep.mubr.f32.mxu0 0.0
        %695 = vmatmul.mubr.f32.gmra.mxu0 %v581
        %v696 = vpop.f32.mrf.mxu0
        %v697 = vadd.f32 %v504, %v696
        %v698 = vpop.f32.mrf.mxu0
        %699 = vmatprep.mubr.f32.mxu0 0.0
        %700 = vmatmul.mubr.f32.gmra.mxu0 %v584
        %v701 = vpop.f32.mrf.mxu0
        %v702 = vadd.f32 %v509, %v701
        %v703 = vpop.f32.mrf.mxu0
        %704 = vmatprep.mubr.f32.mxu0 0.0
        %705 = vmatmul.mubr.f32.gmra.mxu0 %v587
        %v706 = vpop.f32.mrf.mxu0
        %v707 = vadd.f32 %v514, %v706
        %v708 = vpop.f32.mrf.mxu0
        %709 = vmatprep.mubr.f32.mxu0 0.0
        %710 = vmatmul.mubr.f32.gmra.mxu0 %v590
        %v711 = vpop.f32.mrf.mxu0
        %v712 = vadd.f32 %v519, %v711
        %v713 = vpop.f32.mrf.mxu0
        %714 = vmatprep.mubr.f32.mxu0 0.0
        %715 = vmatmul.mubr.f32.gmra.mxu0 %v593
        %v716 = vpop.f32.mrf.mxu0
        %v717 = vadd.f32 %v524, %v716
        %v718 = vpop.f32.mrf.mxu0
        %719 = vmatprep.mubr.f32.mxu0 0.0
        %720 = vmatmul.mubr.f32.gmra.mxu0 %v596
        %v721 = vpop.f32.mrf.mxu0
        %v722 = vadd.f32 %v529, %v721
        %v723 = vpop.f32.mrf.mxu0
        %724 = vmatprep.mubr.f32.mxu0 0.0
        %725 = vmatmul.mubr.f32.gmra.mxu0 %v599
        %v726 = vpop.f32.mrf.mxu0
        %v727 = vadd.f32 %v534, %v726
        %v728 = vpop.f32.mrf.mxu0
        %729 = vmatprep.mubr.f32.mxu0 0.0
        %730 = vmatmul.mubr.f32.gmra.mxu0 %v602
        %v731 = vpop.f32.mrf.mxu0
        %v732 = vadd.f32 %v539, %v731
        %v733 = vpop.f32.mrf.mxu0
        %734 = vmatprep.mubr.f32.mxu0 0.0
        %735 = vmatmul.mubr.f32.gmra.mxu0 %v605
        %v736 = vpop.f32.mrf.mxu0
        %v737 = vadd.f32 %v544, %v736
        %v738 = vpop.f32.mrf.mxu0
        %739 = vmatprep.mubr.f32.mxu0 0.0
        %740 = vmatmul.mubr.f32.gmra.mxu0 %v608
        %v741 = vpop.f32.mrf.mxu0
        %v742 = vadd.f32 %v549, %v741
        %v743 = vpop.f32.mrf.mxu0
        %744 = vmatprep.mubr.f32.mxu0 0.0
        %745 = vmatmul.mubr.f32.gmra.mxu0 %v611
        %v746 = vpop.f32.mrf.mxu0
        %v747 = vadd.f32 %v554, %v746
        %v748 = vpop.f32.mrf.mxu0
        %749 = vmatprep.mubr.f32.mxu0 0.0
        %750 = vmatmul.mubr.f32.gmra.mxu0 %v614
        %v751 = vpop.f32.mrf.mxu0
        %v752 = vadd.f32 %v559, %v751
        %v753 = vpop.f32.mrf.mxu0
        %754 = vmatprep.mubr.f32.mxu0 0.0
        %755 = vmatmul.mubr.f32.gmra.mxu0 %v617
        %v756 = vpop.f32.mrf.mxu0
        %v757 = vadd.f32 %v564, %v756
        %v758 = vpop.f32.mrf.mxu0
        %759 = vmatprep.mubr.f32.mxu0 0.0
        %760 = vmatmul.mubr.f32.gmra.mxu0 %v620
        %v761 = vpop.f32.mrf.mxu0
        %v762 = vadd.f32 %v569, %v761
        %v763 = vpop.f32.mrf.mxu0
        %764 = vmatprep.mubr.f32.mxu0 0.0
        %765 = vmatmul.mubr.f32.gmra.mxu0 %v623
        %v766 = vpop.f32.mrf.mxu0
        %v767 = vadd.f32 %v574, %v766
        %v768 = vpop.f32.mrf.mxu0
        %769 = vdwg.mxu0
        %v770 = vld [vmem:[%s4] sm:$0x1]
        %v772 = vlaneseq
        %v773 = vshrl.u32 %v772, 7
        %v774 = vsub.s32 0, %v773
        %v775 = vrot.slane %v770, %v774
        %v777 = vadd.f32 %v692, %v775
        %v778 = vadd.f32 %v697, %v775
        %v779 = vadd.f32 %v702, %v775
        %v780 = vadd.f32 %v707, %v775
        %v781 = vadd.f32 %v712, %v775
        %v782 = vadd.f32 %v717, %v775
        %v783 = vadd.f32 %v722, %v775
        %v784 = vadd.f32 %v727, %v775
        %v785 = vadd.f32 %v732, %v775
        %v786 = vadd.f32 %v737, %v775
        %v787 = vadd.f32 %v742, %v775
        %v788 = vadd.f32 %v747, %v775
        %v789 = vadd.f32 %v752, %v775
        %v790 = vadd.f32 %v757, %v775
        %v791 = vadd.f32 %v762, %v775
        %v792 = vadd.f32 %v767, %v775
        %v793 = vmax.f32 %v777, 0.0
        %v794 = vmax.f32 %v778, 0.0
        %v795 = vmax.f32 %v779, 0.0
        %v796 = vmax.f32 %v780, 0.0
        %v797 = vmax.f32 %v781, 0.0
        %v798 = vmax.f32 %v782, 0.0
        %v799 = vmax.f32 %v783, 0.0
        %v800 = vmax.f32 %v784, 0.0
        %v801 = vmax.f32 %v785, 0.0
        %v802 = vmax.f32 %v786, 0.0
        %v803 = vmax.f32 %v787, 0.0
        %v804 = vmax.f32 %v788, 0.0
        %v805 = vmax.f32 %v789, 0.0
        %v806 = vmax.f32 %v790, 0.0
        %v807 = vmax.f32 %v791, 0.0
        %v808 = vmax.f32 %v792, 0.0
        %v809 = vld [vmem:[%s5] sm:$0x1]
        %v811 = vlaneseq
        %v812 = vshrl.u32 %v811, 7
        %v813 = vsub.s32 0, %v812
        %v814 = vrot.slane %v809, %v813
        %v816 = vmul.f32 %v793, %v814
        %v817 = vmul.f32 %v794, %v814
        %v818 = vmul.f32 %v795, %v814
        %v819 = vmul.f32 %v796, %v814
        %v820 = vmul.f32 %v797, %v814
        %v821 = vmul.f32 %v798, %v814
        %v822 = vmul.f32 %v799, %v814
        %v823 = vmul.f32 %v800, %v814
        %v824 = vmul.f32 %v801, %v814
        %v825 = vmul.f32 %v802, %v814
        %v826 = vmul.f32 %v803, %v814
        %v827 = vmul.f32 %v804, %v814
        %v828 = vmul.f32 %v805, %v814
        %v829 = vmul.f32 %v806, %v814
        %v830 = vmul.f32 %v807, %v814
        %v831 = vmul.f32 %v808, %v814
        %v832 = vsel %vm383, %v816, 0.0
        %833 = vadd.xlane.f32.xlu0 %v832
        %v834 = vpop.xlane.xlu0 %833
        %v835 = vsel %vm383, %v817, 0.0
        %836 = vadd.xlane.f32.xlu0 %v835
        %v837 = vpop.xlane.xlu0 %836
        %v838 = vsel %vm383, %v818, 0.0
        %839 = vadd.xlane.f32.xlu0 %v838
        %v840 = vpop.xlane.xlu0 %839
        %v841 = vsel %vm383, %v819, 0.0
        %842 = vadd.xlane.f32.xlu0 %v841
        %v843 = vpop.xlane.xlu0 %842
        %v844 = vsel %vm383, %v820, 0.0
        %845 = vadd.xlane.f32.xlu0 %v844
        %v846 = vpop.xlane.xlu0 %845
        %v847 = vsel %vm383, %v821, 0.0
        %848 = vadd.xlane.f32.xlu0 %v847
        %v849 = vpop.xlane.xlu0 %848
        %v850 = vsel %vm383, %v822, 0.0
        %851 = vadd.xlane.f32.xlu0 %v850
        %v852 = vpop.xlane.xlu0 %851
        %v853 = vsel %vm383, %v823, 0.0
        %854 = vadd.xlane.f32.xlu0 %v853
        %v855 = vpop.xlane.xlu0 %854
        %v856 = vsel %vm383, %v824, 0.0
        %857 = vadd.xlane.f32.xlu0 %v856
        %v858 = vpop.xlane.xlu0 %857
        %v859 = vsel %vm383, %v825, 0.0
        %860 = vadd.xlane.f32.xlu0 %v859
        %v861 = vpop.xlane.xlu0 %860
        %v862 = vsel %vm383, %v826, 0.0
        %863 = vadd.xlane.f32.xlu0 %v862
        %v864 = vpop.xlane.xlu0 %863
        %v865 = vsel %vm383, %v827, 0.0
        %866 = vadd.xlane.f32.xlu0 %v865
        %v867 = vpop.xlane.xlu0 %866
        %v868 = vsel %vm383, %v828, 0.0
        %869 = vadd.xlane.f32.xlu0 %v868
        %v870 = vpop.xlane.xlu0 %869
        %v871 = vsel %vm383, %v829, 0.0
        %872 = vadd.xlane.f32.xlu0 %v871
        %v873 = vpop.xlane.xlu0 %872
        %v874 = vsel %vm383, %v830, 0.0
        %875 = vadd.xlane.f32.xlu0 %v874
        %v876 = vpop.xlane.xlu0 %875
        %v877 = vsel %vm383, %v831, 0.0
        %878 = vadd.xlane.f32.xlu0 %v877
        %v879 = vpop.xlane.xlu0 %878
        %s880 = sld [smem:[#allocation2]]
        %v881 = vstv %s880
        %v882 = vadd.f32 %v834, %v881
        %v883 = vadd.f32 %v837, %v881
        %v884 = vadd.f32 %v840, %v881
        %v885 = vadd.f32 %v843, %v881
        %v886 = vadd.f32 %v846, %v881
        %v887 = vadd.f32 %v849, %v881
        %v888 = vadd.f32 %v852, %v881
        %v889 = vadd.f32 %v855, %v881
        %v890 = vadd.f32 %v858, %v881
        %v891 = vadd.f32 %v861, %v881
        %v892 = vadd.f32 %v864, %v881
        %v893 = vadd.f32 %v867, %v881
        %v894 = vadd.f32 %v870, %v881
        %v895 = vadd.f32 %v873, %v881
        %v896 = vadd.f32 %v876, %v881
        %v897 = vadd.f32 %v879, %v881
        %v898 = vxor.u32 %v882, 2147483648
        %v899 = vxor.u32 %v883, 2147483648
        %v900 = vxor.u32 %v884, 2147483648
        %v901 = vxor.u32 %v885, 2147483648
        %v902 = vxor.u32 %v886, 2147483648
        %v903 = vxor.u32 %v887, 2147483648
        %v904 = vxor.u32 %v888, 2147483648
        %v905 = vxor.u32 %v889, 2147483648
        %v906 = vxor.u32 %v890, 2147483648
        %v907 = vxor.u32 %v891, 2147483648
        %v908 = vxor.u32 %v892, 2147483648
        %v909 = vxor.u32 %v893, 2147483648
        %v910 = vxor.u32 %v894, 2147483648
        %v911 = vxor.u32 %v895, 2147483648
        %v912 = vxor.u32 %v896, 2147483648
        %v913 = vxor.u32 %v897, 2147483648
        %v914 = vmul.f32 %v898, 1.442695
        %v915 = vpow.pop %v914
        %v916 = vmul.f32 %v899, 1.442695
        %v917 = vpow.pop %v916
        %v918 = vmul.f32 %v900, 1.442695
        %v919 = vpow.pop %v918
        %v920 = vmul.f32 %v901, 1.442695
        %v921 = vpow.pop %v920
        %v922 = vmul.f32 %v902, 1.442695
        %v923 = vpow.pop %v922
        %v924 = vmul.f32 %v903, 1.442695
        %v925 = vpow.pop %v924
        %v926 = vmul.f32 %v904, 1.442695
        %v927 = vpow.pop %v926
        %v928 = vmul.f32 %v905, 1.442695
        %v929 = vpow.pop %v928
        %v930 = vmul.f32 %v906, 1.442695
        %v931 = vpow.pop %v930
        %v932 = vmul.f32 %v907, 1.442695
        %v933 = vpow.pop %v932
        %v934 = vmul.f32 %v908, 1.442695
        %v935 = vpow.pop %v934
        %v936 = vmul.f32 %v909, 1.442695
        %v937 = vpow.pop %v936
        %v938 = vmul.f32 %v910, 1.442695
        %v939 = vpow.pop %v938
        %v940 = vmul.f32 %v911, 1.442695
        %v941 = vpow.pop %v940
        %v942 = vmul.f32 %v912, 1.442695
        %v943 = vpow.pop %v942
        %v944 = vmul.f32 %v913, 1.442695
        %v945 = vpow.pop %v944
        %v946 = vadd.f32 %v915, 1.0
        %v947 = vadd.f32 %v917, 1.0
        %v948 = vadd.f32 %v919, 1.0
        %v949 = vadd.f32 %v921, 1.0
        %v950 = vadd.f32 %v923, 1.0
        %v951 = vadd.f32 %v925, 1.0
        %v952 = vadd.f32 %v927, 1.0
        %v953 = vadd.f32 %v929, 1.0
        %v954 = vadd.f32 %v931, 1.0
        %v955 = vadd.f32 %v933, 1.0
        %v956 = vadd.f32 %v935, 1.0
        %v957 = vadd.f32 %v937, 1.0
        %v958 = vadd.f32 %v939, 1.0
        %v959 = vadd.f32 %v941, 1.0
        %v960 = vadd.f32 %v943, 1.0
        %v961 = vadd.f32 %v945, 1.0
        %v962 = vrcp.pop %v946
        %v963 = vmul.f32 1.0, %v962
        %v964 = vrcp.pop %v947
        %v965 = vmul.f32 1.0, %v964
        %v966 = vrcp.pop %v948
        %v967 = vmul.f32 1.0, %v966
        %v968 = vrcp.pop %v949
        %v969 = vmul.f32 1.0, %v968
        %v970 = vrcp.pop %v950
        %v971 = vmul.f32 1.0, %v970
        %v972 = vrcp.pop %v951
        %v973 = vmul.f32 1.0, %v972
        %v974 = vrcp.pop %v952
        %v975 = vmul.f32 1.0, %v974
        %v976 = vrcp.pop %v953
        %v977 = vmul.f32 1.0, %v976
        %v978 = vrcp.pop %v954
        %v979 = vmul.f32 1.0, %v978
        %v980 = vrcp.pop %v955
        %v981 = vmul.f32 1.0, %v980
        %v982 = vrcp.pop %v956
        %v983 = vmul.f32 1.0, %v982
        %v984 = vrcp.pop %v957
        %v985 = vmul.f32 1.0, %v984
        %v986 = vrcp.pop %v958
        %v987 = vmul.f32 1.0, %v986
        %v988 = vrcp.pop %v959
        %v989 = vmul.f32 1.0, %v988
        %v990 = vrcp.pop %v960
        %v991 = vmul.f32 1.0, %v990
        %v992 = vrcp.pop %v961
        %v993 = vmul.f32 1.0, %v992
        %vm994 = vcmask 7168
        %995 = vst.msk [vmem:[%s309] sm:$0xff] %vm994, %v963
        %996 = vst.msk [vmem:[%s309 + $0x8] sm:$0xff] %vm994, %v965
        %997 = vst.msk [vmem:[%s309 + $0x10] sm:$0xff] %vm994, %v967
        %998 = vst.msk [vmem:[%s309 + $0x18] sm:$0xff] %vm994, %v969
        %999 = vst.msk [vmem:[%s309 + $0x20] sm:$0xff] %vm994, %v971
        %1000 = vst.msk [vmem:[%s309 + $0x28] sm:$0xff] %vm994, %v973
        %1001 = vst.msk [vmem:[%s309 + $0x30] sm:$0xff] %vm994, %v975
        %1002 = vst.msk [vmem:[%s309 + $0x38] sm:$0xff] %vm994, %v977
        %1003 = vst.msk [vmem:[%s309 + $0x40] sm:$0xff] %vm994, %v979
        %1004 = vst.msk [vmem:[%s309 + $0x48] sm:$0xff] %vm994, %v981
        %1005 = vst.msk [vmem:[%s309 + $0x50] sm:$0xff] %vm994, %v983
        %1006 = vst.msk [vmem:[%s309 + $0x58] sm:$0xff] %vm994, %v985
        %1007 = vst.msk [vmem:[%s309 + $0x60] sm:$0xff] %vm994, %v987
        %1008 = vst.msk [vmem:[%s309 + $0x68] sm:$0xff] %vm994, %v989
        %1009 = vst.msk [vmem:[%s309 + $0x70] sm:$0xff] %vm994, %v991
        %1010 = vst.msk [vmem:[%s309 + $0x78] sm:$0xff] %vm994, %v993
        %s1011 = sand.u32 %s184, 1
        %s1012 = sand.u32 %s184, 1
        %s1013 = smul.addr %s1012, 128
        %s1014 = scalar_lea.vmem [#allocation3], %s1013
        // Predicated region
        $region49: #{tpu_custom_call.1} parent=47 // pred_check
          %p1015 = pneg %p194
        $region50: #{tpu_custom_call.1} parent=47 // pred_check_branch
          %1017 = sbr.rel (%p1015) target = $region52
        $region51: #{tpu_custom_call.1} parent=47 // pred_region
          %s1018 = smul.u32 16, %s19
          %s1019 = ssub.s32 25, %s1018
          %p1020 = scmp.lt.s32.totalorder %s1019, 16
          %s1021 = scalar_select %p1020, %s1019, 16
          %s1022 = smul.u32 128, %s1021
          %p1023 = scmp.ne.s32.totalorder 0, %s1022
          %s1024 = smul.addr %s1018, 8
          %s1025 = scalar_lea.vmem %s7, %s1024
          // Predicated region
          $region53: #{tpu_custom_call.1} parent=51 // pred_check
            %p1026 = pneg %p1023
          $region54: #{tpu_custom_call.1} parent=51 // pred_check_branch
            %1028 = sbr.rel (%p1026) target = $region56
          $region55: #{tpu_custom_call.1} parent=51 // pred_region
            // Predicated region
            $region57: #{tpu_custom_call.1} parent=55 // pred_check
              _
            $region58: #{tpu_custom_call.1} parent=55 // pred_check_branch
              %1030 = sbr.rel (0) target = $region60
            $region59: #{tpu_custom_call.1} parent=55 // pred_region
              // Predicated region
              $region79: #{tpu_custom_call.1} parent=59 // pred_check
                _
              $region80: #{tpu_custom_call.1} parent=59 // pred_check_branch
                %1110 = sbr.rel (0) target = $region82
              $region81: #{tpu_custom_call.1} parent=59 // pred_region
                %s1111 = sshrl.u32 %s1021, 4
                // While loop
                $region83: #{tpu_custom_call.1} parent=81 // loop_pre_header
                  _
                $region84: #{tpu_custom_call.1} parent=81 // loop_header
                  %s1113 = sphi 0, %s1115
                  %p1114 = scmp.ge.s32.totalorder %s1113, %s1111
                  %s1118 = sphi 0, %s1155
                  %s1119 = sphi %s1014, %s1158
                  %s1120 = sphi %s1025, %s1159
                $region85: #{tpu_custom_call.1} parent=81 // loop_header_branch
                  %1117 = sbr.rel (%p1114) target = $region89
                $region86: #{tpu_custom_call.1} parent=81 // loop_body
                  %v1121 = vld [vmem:[%s1119] sm:$0xff]
                  %1122 = vst [vmem:[%s1120] sm:$0xff] %v1121
                  %v1123 = vld [vmem:[%s1119 + $0x8] sm:$0xff]
                  %1124 = vst [vmem:[%s1120 + $0x8] sm:$0xff] %v1123
                  %v1125 = vld [vmem:[%s1119 + $0x10] sm:$0xff]
                  %1126 = vst [vmem:[%s1120 + $0x10] sm:$0xff] %v1125
                  %v1127 = vld [vmem:[%s1119 + $0x18] sm:$0xff]
                  %1128 = vst [vmem:[%s1120 + $0x18] sm:$0xff] %v1127
                  %v1129 = vld [vmem:[%s1119 + $0x20] sm:$0xff]
                  %1130 = vst [vmem:[%s1120 + $0x20] sm:$0xff] %v1129
                  %v1131 = vld [vmem:[%s1119 + $0x28] sm:$0xff]
                  %1132 = vst [vmem:[%s1120 + $0x28] sm:$0xff] %v1131
                  %v1133 = vld [vmem:[%s1119 + $0x30] sm:$0xff]
                  %1134 = vst [vmem:[%s1120 + $0x30] sm:$0xff] %v1133
                  %v1135 = vld [vmem:[%s1119 + $0x38] sm:$0xff]
                  %1136 = vst [vmem:[%s1120 + $0x38] sm:$0xff] %v1135
                  %v1137 = vld [vmem:[%s1119 + $0x40] sm:$0xff]
                  %1138 = vst [vmem:[%s1120 + $0x40] sm:$0xff] %v1137
                  %v1139 = vld [vmem:[%s1119 + $0x48] sm:$0xff]
                  %1140 = vst [vmem:[%s1120 + $0x48] sm:$0xff] %v1139
                  %v1141 = vld [vmem:[%s1119 + $0x50] sm:$0xff]
                  %1142 = vst [vmem:[%s1120 + $0x50] sm:$0xff] %v1141
                  %v1143 = vld [vmem:[%s1119 + $0x58] sm:$0xff]
                  %1144 = vst [vmem:[%s1120 + $0x58] sm:$0xff] %v1143
                  %v1145 = vld [vmem:[%s1119 + $0x60] sm:$0xff]
                  %1146 = vst [vmem:[%s1120 + $0x60] sm:$0xff] %v1145
                  %v1147 = vld [vmem:[%s1119 + $0x68] sm:$0xff]
                  %1148 = vst [vmem:[%s1120 + $0x68] sm:$0xff] %v1147
                  %v1149 = vld [vmem:[%s1119 + $0x70] sm:$0xff]
                  %1150 = vst [vmem:[%s1120 + $0x70] sm:$0xff] %v1149
                  %v1151 = vld [vmem:[%s1119 + $0x78] sm:$0xff]
                  %1152 = vst [vmem:[%s1120 + $0x78] sm:$0xff] %v1151
                  %s1153 = sadd.s32 1, %s1118
                  %p1154 = scmp.ge.s32.totalorder %s1153, %s1111
                  %s1155 = scalar_select %p1154, 0, %s1153
                  %s1156 = smul.u32 %s1155, 128
                  %s1157 = smul.u32 %s1155, 128
                  %s1158 = scalar_lea.vmem %s1014, %s1156 [#allocation3]
                  %s1159 = scalar_lea.vmem %s1025, %s1157
                $region87: #{tpu_custom_call.1} parent=81 // loop_footer
                  %s1115 = sadd.s32 %s1113, 1
                $region88: #{tpu_custom_call.1} parent=81 // loop_footer_branch
                  %1112 = sbr.rel target = $region84
                $region89: #{tpu_custom_call.1} parent=81 // loop_exit
                  _
                %s1160 = sshrl.u32 %s1021, 4
                %s1161 = sand.u32 %s1021, 15
                %s1162 = smul.u32 %s1160, 16
                %s1163 = smul.u32 8, %s1162
                %s1164 = scalar_lea.vmem %s1014, %s1163 [#allocation3]
                %s1165 = smul.u32 8, %s1162
                %s1166 = scalar_lea.vmem %s1025, %s1165
                // While loop
                $region90: #{tpu_custom_call.1} parent=81 // loop_pre_header
                  _
                $region91: #{tpu_custom_call.1} parent=81 // loop_header
                  %s1168 = sphi 0, %s1170
                  %p1169 = scmp.ge.s32.totalorder %s1168, %s1161
                  %s1173 = sphi 0, %s1180
                  %s1174 = sphi %s1164, %s1183
                  %s1175 = sphi %s1166, %s1184
                $region92: #{tpu_custom_call.1} parent=81 // loop_header_branch
                  %1172 = sbr.rel (%p1169) target = $region96
                $region93: #{tpu_custom_call.1} parent=81 // loop_body
                  %v1176 = vld [vmem:[%s1174] sm:$0xff]
                  %1177 = vst [vmem:[%s1175] sm:$0xff] %v1176
                  %s1178 = sadd.s32 1, %s1173
                  %p1179 = scmp.ge.s32.totalorder %s1178, %s1161
                  %s1180 = scalar_select %p1179, 0, %s1178
                  %s1181 = smul.u32 %s1180, 8
                  %s1182 = smul.u32 %s1180, 8
                  %s1183 = scalar_lea.vmem %s1164, %s1181 [#allocation3]
                  %s1184 = scalar_lea.vmem %s1166, %s1182
                $region94: #{tpu_custom_call.1} parent=81 // loop_footer
                  %s1170 = sadd.s32 %s1168, 1
                $region95: #{tpu_custom_call.1} parent=81 // loop_footer_branch
                  %1167 = sbr.rel target = $region91
                $region96: #{tpu_custom_call.1} parent=81 // loop_exit
                  _
              $region82: #{tpu_custom_call.1} parent=59 // pred_fallthru
                _
              // Predicated region
              $region97: #{tpu_custom_call.1} parent=59 // pred_check
                _
              $region98: #{tpu_custom_call.1} parent=59 // pred_check_branch
                %1186 = sbr.rel target = $region100
              $region99: #{tpu_custom_call.1} parent=59 // pred_region
                _
              $region100: #{tpu_custom_call.1} parent=59 // pred_fallthru
                _
            $region60: #{tpu_custom_call.1} parent=55 // pred_fallthru
              _
            // Predicated region
            $region61: #{tpu_custom_call.1} parent=55 // pred_check
              _
            $region62: #{tpu_custom_call.1} parent=55 // pred_check_branch
              %1032 = sbr.rel target = $region64
            $region63: #{tpu_custom_call.1} parent=55 // pred_region
              %s1034 = ssub.s32 256, 1
              %s1035 = sshrl.u32 %s1021, 4
              // While loop
              $region65: #{tpu_custom_call.1} parent=63 // loop_pre_header
                _
              $region66: #{tpu_custom_call.1} parent=63 // loop_header
                %s1037 = sphi 0, %s1039
                %p1038 = scmp.ge.s32.totalorder %s1037, %s1035
                %s1042 = sphi 0, %s1079
                %s1043 = sphi %s1014, %s1082
                %s1044 = sphi %s1025, %s1083
              $region67: #{tpu_custom_call.1} parent=63 // loop_header_branch
                %1041 = sbr.rel (%p1038) target = $region71
              $region68: #{tpu_custom_call.1} parent=63 // loop_body
                %v1045 = vld [vmem:[%s1043] sm:%s1034]
                %1046 = vst [vmem:[%s1044] sm:%s1034] %v1045
                %v1047 = vld [vmem:[%s1043 + $0x8] sm:%s1034]
                %1048 = vst [vmem:[%s1044 + $0x8] sm:%s1034] %v1047
                %v1049 = vld [vmem:[%s1043 + $0x10] sm:%s1034]
                %1050 = vst [vmem:[%s1044 + $0x10] sm:%s1034] %v1049
                %v1051 = vld [vmem:[%s1043 + $0x18] sm:%s1034]
                %1052 = vst [vmem:[%s1044 + $0x18] sm:%s1034] %v1051
                %v1053 = vld [vmem:[%s1043 + $0x20] sm:%s1034]
                %1054 = vst [vmem:[%s1044 + $0x20] sm:%s1034] %v1053
                %v1055 = vld [vmem:[%s1043 + $0x28] sm:%s1034]
                %1056 = vst [vmem:[%s1044 + $0x28] sm:%s1034] %v1055
                %v1057 = vld [vmem:[%s1043 + $0x30] sm:%s1034]
                %1058 = vst [vmem:[%s1044 + $0x30] sm:%s1034] %v1057
                %v1059 = vld [vmem:[%s1043 + $0x38] sm:%s1034]
                %1060 = vst [vmem:[%s1044 + $0x38] sm:%s1034] %v1059
                %v1061 = vld [vmem:[%s1043 + $0x40] sm:%s1034]
                %1062 = vst [vmem:[%s1044 + $0x40] sm:%s1034] %v1061
                %v1063 = vld [vmem:[%s1043 + $0x48] sm:%s1034]
                %1064 = vst [vmem:[%s1044 + $0x48] sm:%s1034] %v1063
                %v1065 = vld [vmem:[%s1043 + $0x50] sm:%s1034]
                %1066 = vst [vmem:[%s1044 + $0x50] sm:%s1034] %v1065
                %v1067 = vld [vmem:[%s1043 + $0x58] sm:%s1034]
                %1068 = vst [vmem:[%s1044 + $0x58] sm:%s1034] %v1067
                %v1069 = vld [vmem:[%s1043 + $0x60] sm:%s1034]
                %1070 = vst [vmem:[%s1044 + $0x60] sm:%s1034] %v1069
                %v1071 = vld [vmem:[%s1043 + $0x68] sm:%s1034]
                %1072 = vst [vmem:[%s1044 + $0x68] sm:%s1034] %v1071
                %v1073 = vld [vmem:[%s1043 + $0x70] sm:%s1034]
                %1074 = vst [vmem:[%s1044 + $0x70] sm:%s1034] %v1073
                %v1075 = vld [vmem:[%s1043 + $0x78] sm:%s1034]
                %1076 = vst [vmem:[%s1044 + $0x78] sm:%s1034] %v1075
                %s1077 = sadd.s32 1, %s1042
                %p1078 = scmp.ge.s32.totalorder %s1077, %s1035
                %s1079 = scalar_select %p1078, 0, %s1077
                %s1080 = smul.u32 %s1079, 128
                %s1081 = smul.u32 %s1079, 128
                %s1082 = scalar_lea.vmem %s1014, %s1080 [#allocation3]
                %s1083 = scalar_lea.vmem %s1025, %s1081
              $region69: #{tpu_custom_call.1} parent=63 // loop_footer
                %s1039 = sadd.s32 %s1037, 1
              $region70: #{tpu_custom_call.1} parent=63 // loop_footer_branch
                %1036 = sbr.rel target = $region66
              $region71: #{tpu_custom_call.1} parent=63 // loop_exit
                _
              %s1084 = sshrl.u32 %s1021, 4
              %s1085 = sand.u32 %s1021, 15
              %s1086 = smul.u32 %s1084, 16
              %s1087 = smul.u32 8, %s1086
              %s1088 = scalar_lea.vmem %s1014, %s1087 [#allocation3]
              %s1089 = smul.u32 8, %s1086
              %s1090 = scalar_lea.vmem %s1025, %s1089
              // While loop
              $region72: #{tpu_custom_call.1} parent=63 // loop_pre_header
                _
              $region73: #{tpu_custom_call.1} parent=63 // loop_header
                %s1092 = sphi 0, %s1094
                %p1093 = scmp.ge.s32.totalorder %s1092, %s1085
                %s1097 = sphi 0, %s1104
                %s1098 = sphi %s1088, %s1107
                %s1099 = sphi %s1090, %s1108
              $region74: #{tpu_custom_call.1} parent=63 // loop_header_branch
                %1096 = sbr.rel (%p1093) target = $region78
              $region75: #{tpu_custom_call.1} parent=63 // loop_body
                %v1100 = vld [vmem:[%s1098] sm:%s1034]
                %1101 = vst [vmem:[%s1099] sm:%s1034] %v1100
                %s1102 = sadd.s32 1, %s1097
                %p1103 = scmp.ge.s32.totalorder %s1102, %s1085
                %s1104 = scalar_select %p1103, 0, %s1102
                %s1105 = smul.u32 %s1104, 8
                %s1106 = smul.u32 %s1104, 8
                %s1107 = scalar_lea.vmem %s1088, %s1105 [#allocation3]
                %s1108 = scalar_lea.vmem %s1090, %s1106
              $region76: #{tpu_custom_call.1} parent=63 // loop_footer
                %s1094 = sadd.s32 %s1092, 1
              $region77: #{tpu_custom_call.1} parent=63 // loop_footer_branch
                %1091 = sbr.rel target = $region73
              $region78: #{tpu_custom_call.1} parent=63 // loop_exit
                _
            $region64: #{tpu_custom_call.1} parent=55 // pred_fallthru
              _
          $region56: #{tpu_custom_call.1} parent=51 // pred_fallthru
            _
          %1187 = vnop
        $region52: #{tpu_custom_call.1} parent=47 // pred_fallthru
          _
      $region48: #{tpu_custom_call.1} parent=5 // pred_fallthru
        _
      %p1188 = scmp.le.s32.totalorder 2, %s14
      // Predicated region
      $region101: #{tpu_custom_call.1} parent=5 // pred_check
        %p1189 = pneg %p1188
      $region102: #{tpu_custom_call.1} parent=5 // pred_check_branch
        %1191 = sbr.rel (%p1189) target = $region104
      $region103: #{tpu_custom_call.1} parent=5 // pred_region
        %s1192 = ssub.s32 %s14, 2
        // Predicated region
        $region105: #{tpu_custom_call.1} parent=103 // pred_check
          %p1193 = pneg %p200
        $region106: #{tpu_custom_call.1} parent=103 // pred_check_branch
          %1195 = sbr.rel (%p1193) target = $region108
        $region107: #{tpu_custom_call.1} parent=103 // pred_region
          %s1196 = sand.u32 %s185, 1
          %s1197 = sand.u32 %s185, 1
          %s1198 = smul.addr %s1197, 128
          %s1199 = scalar_lea.vmem [#allocation3], %s1198
        $region108: #{tpu_custom_call.1} parent=103 // pred_fallthru
          _
      $region104: #{tpu_custom_call.1} parent=5 // pred_fallthru
        _
    $region6: #{tpu_custom_call.1} parent=1 // loop_footer
      %s18 = sadd.s32 1, %s14
    $region7: #{tpu_custom_call.1} parent=1 // loop_footer_branch
      %13 = sbr.rel target = $region3
    $region8: #{tpu_custom_call.1} parent=1 // loop_exit
      _

</llo_original>
